<compile_context>
chip_gen: v5e
topology: v5e:2x2
jax: 0.10.0
libtpu: 0.0.40
codegen_flags: <defaults>
</compile_context>

<pallas_src>
import functools

import jax
import jax.numpy as jnp
from jax.experimental import pallas as pl
from jax.experimental.pallas import tpu as pltpu


def _bernoulli_gating_kernel(x_ref, z_ref, o_ref, *, num_particles):
    # x_ref : VMEM (1, P, TP, C)   input tile
    # z_ref : VMEM (P, C)          Bernoulli mask, already scaled by 1/P
    # o_ref : VMEM (1, TP, C)      output tile
    #
    # out[t, c] = sum_p x[p, t, c] * z[p, c]        (z already carries 1/P)
    # Accumulate one particle slab at a time in f32 to avoid materializing the
    # full (P, TP, C) intermediate.
    acc = x_ref[0, 0, :, :].astype(jnp.float32) * z_ref[0, :]
    for p in range(1, num_particles):
        acc = acc + x_ref[0, p, :, :].astype(jnp.float32) * z_ref[p, :]
    o_ref[0, :, :] = acc.astype(o_ref.dtype)


def _pick_patch_tile(num_particles, patches, channels, itemsize,
                     budget_bytes=4 << 20):
    """Largest patch-tile (multiple of 8, or full extent) within a VMEM budget."""
    row_bytes = max(1, num_particles * channels * itemsize)
    rows = budget_bytes // row_bytes
    if rows >= patches:
        return patches
    rows = max(8, (rows // 8) * 8)
    return min(rows, patches)


def bernoulli_gating(x, z_filter, *, key, num_particles=None):
    """x: (B, P, patches, C); z_filter: (C,) logits.  Returns (B, patches, C)."""
    B, P, patches, C = x.shape
    if num_particles is not None:
        assert P == num_particles, "particle axis must be x.shape[1]"

    # z ~ Bernoulli(sigmoid(z_filter)), drawn once per forward pass (module
    # semantics).  Fold the 1/P of the particle-mean into the (P, C) mask: this
    # is O(P*C) wrapper work and removes a per-output-element multiply.
    probs = jax.nn.sigmoid(z_filter.astype(jnp.float32))                 # (C,)
    z = jax.random.bernoulli(key, probs, shape=(P, C)).astype(jnp.float32)
    z_scaled = z * jnp.float32(1.0 / P)                                  # (P, C)

    itemsize = jnp.dtype(x.dtype).itemsize
    TP = _pick_patch_tile(P, patches, C, itemsize)
    n_patch_tiles = pl.cdiv(patches, TP)

    cost = pl.CostEstimate(
        flops=2 * B * P * patches * C,
        transcendentals=0,
        bytes_accessed=(B * P * patches * C + B * patches * C) * itemsize
        + P * C * 4,
    )

    kernel = functools.partial(_bernoulli_gating_kernel, num_particles=P)

    return pl.pallas_call(
        kernel,
        out_shape=jax.ShapeDtypeStruct((B, patches, C), x.dtype),
        grid=(B, n_patch_tiles),
        in_specs=[
            pl.BlockSpec((1, P, TP, C), lambda b, t: (b, 0, t, 0)),
            pl.BlockSpec((P, C), lambda b, t: (0, 0)),
        ],
        out_specs=pl.BlockSpec((1, TP, C), lambda b, t: (b, t, 0)),
        compiler_params=pltpu.CompilerParams(
            dimension_semantics=("parallel", "parallel")),
        cost_estimate=cost,
    )(x, z_scaled)


if __name__ == "__main__":
    # Small shapes consistent with the module (channels chosen lane-dense = 128).
    batch = 2
    num_particles = 4
    num_patches = 16
    num_channels = 128
    p_default = 0.3

    # Deterministic parameter init (mirrors __init__): z_filter = logit(p_default).
    z_filter = jnp.full(
        (num_channels,),
        jnp.log(jnp.float32(p_default) / (1.0 - jnp.float32(p_default))),
        dtype=jnp.float32,
    )

    key = jax.random.PRNGKey(0)
    key_x, key_z = jax.random.split(key)
    x = jax.random.normal(
        key_x, (batch, num_particles, num_patches, num_channels),
        dtype=jnp.float32,
    )

    out = bernoulli_gating(x, z_filter, key=key_z, num_particles=num_particles)
    out = jax.block_until_ready(out)
    assert out.shape == (batch, num_patches, num_channels)
    assert bool(jnp.all(jnp.isfinite(out)))

    # Reference check: same mask, pure-JAX reduction.
    probs = jax.nn.sigmoid(z_filter)
    z_ref = jax.random.bernoulli(
        key_z, probs, shape=(num_particles, num_channels)).astype(jnp.float32)
    ref = jnp.sum(x * z_ref[None, :, None, :], axis=1) / num_particles
    assert bool(jnp.allclose(out, ref, atol=1e-5, rtol=1e-5))

    print("KERNEL_OK")
</pallas_src>

<mosaic_0001>
module attributes {stable_mosaic.version = 11 : i64} {
  func.func @_bernoulli_gating_kernel(%arg0: i32, %arg1: i32, %arg2: memref<1x4x16x128xf32, #tpu.memory_space<vmem>>, %arg3: memref<4x128xf32, #tpu.memory_space<vmem>>, %arg4: memref<1x16x128xf32, #tpu.memory_space<vmem>>) attributes {dimension_semantics = [#tpu.dimension_semantics<parallel>, #tpu.dimension_semantics<parallel>], iteration_bounds = array<i64: 2, 1>, scalar_prefetch = 0 : i64, scratch_operands = 0 : i64, tpu.core_type = #tpu.core_type<tc>, window_params = [{transform_indices = @transform_0, window_bounds = array<i64: 1, 4, 16, 128>}, {pipeline_mode = #tpu.pipeline_mode<synchronous>, transform_indices = @transform_1, window_bounds = array<i64: 4, 128>}, {transform_indices = @transform_2, window_bounds = array<i64: 1, 16, 128>}]} {
    %c0 = arith.constant 0 : index
    %c0_0 = arith.constant 0 : index
    %c0_1 = arith.constant 0 : index
    %c0_2 = arith.constant 0 : index
    %0 = vector.load %arg2[%c0, %c0_0, %c0_1, %c0_2] : memref<1x4x16x128xf32, #tpu.memory_space<vmem>>, vector<1x1x16x128xf32>
    %1 = vector.shape_cast %0 : vector<1x1x16x128xf32> to vector<16x128xf32>
    %c0_3 = arith.constant 0 : index
    %c0_4 = arith.constant 0 : index
    %2 = vector.load %arg3[%c0_3, %c0_4] : memref<4x128xf32, #tpu.memory_space<vmem>>, vector<1x128xf32>
    %3 = vector.shape_cast %2 : vector<1x128xf32> to vector<128xf32>
    %4 = vector.shape_cast %3 : vector<128xf32> to vector<1x128xf32>
    %5 = vector.broadcast %4 : vector<1x128xf32> to vector<16x128xf32>
    %6 = arith.mulf %1, %5 : vector<16x128xf32>
    %c0_5 = arith.constant 0 : index
    %c1 = arith.constant 1 : index
    %c0_6 = arith.constant 0 : index
    %c0_7 = arith.constant 0 : index
    %7 = vector.load %arg2[%c0_5, %c1, %c0_6, %c0_7] : memref<1x4x16x128xf32, #tpu.memory_space<vmem>>, vector<1x1x16x128xf32>
    %8 = vector.shape_cast %7 : vector<1x1x16x128xf32> to vector<16x128xf32>
    %c1_8 = arith.constant 1 : index
    %c0_9 = arith.constant 0 : index
    %9 = vector.load %arg3[%c1_8, %c0_9] : memref<4x128xf32, #tpu.memory_space<vmem>>, vector<1x128xf32>
    %10 = vector.shape_cast %9 : vector<1x128xf32> to vector<128xf32>
    %11 = vector.shape_cast %10 : vector<128xf32> to vector<1x128xf32>
    %12 = vector.broadcast %11 : vector<1x128xf32> to vector<16x128xf32>
    %13 = arith.mulf %8, %12 : vector<16x128xf32>
    %14 = arith.addf %6, %13 : vector<16x128xf32>
    %c0_10 = arith.constant 0 : index
    %c2 = arith.constant 2 : index
    %c0_11 = arith.constant 0 : index
    %c0_12 = arith.constant 0 : index
    %15 = vector.load %arg2[%c0_10, %c2, %c0_11, %c0_12] : memref<1x4x16x128xf32, #tpu.memory_space<vmem>>, vector<1x1x16x128xf32>
    %16 = vector.shape_cast %15 : vector<1x1x16x128xf32> to vector<16x128xf32>
    %c2_13 = arith.constant 2 : index
    %c0_14 = arith.constant 0 : index
    %17 = vector.load %arg3[%c2_13, %c0_14] : memref<4x128xf32, #tpu.memory_space<vmem>>, vector<1x128xf32>
    %18 = vector.shape_cast %17 : vector<1x128xf32> to vector<128xf32>
    %19 = vector.shape_cast %18 : vector<128xf32> to vector<1x128xf32>
    %20 = vector.broadcast %19 : vector<1x128xf32> to vector<16x128xf32>
    %21 = arith.mulf %16, %20 : vector<16x128xf32>
    %22 = arith.addf %14, %21 : vector<16x128xf32>
    %c0_15 = arith.constant 0 : index
    %c3 = arith.constant 3 : index
    %c0_16 = arith.constant 0 : index
    %c0_17 = arith.constant 0 : index
    %23 = vector.load %arg2[%c0_15, %c3, %c0_16, %c0_17] : memref<1x4x16x128xf32, #tpu.memory_space<vmem>>, vector<1x1x16x128xf32>
    %24 = vector.shape_cast %23 : vector<1x1x16x128xf32> to vector<16x128xf32>
    %c3_18 = arith.constant 3 : index
    %c0_19 = arith.constant 0 : index
    %25 = vector.load %arg3[%c3_18, %c0_19] : memref<4x128xf32, #tpu.memory_space<vmem>>, vector<1x128xf32>
    %26 = vector.shape_cast %25 : vector<1x128xf32> to vector<128xf32>
    %27 = vector.shape_cast %26 : vector<128xf32> to vector<1x128xf32>
    %28 = vector.broadcast %27 : vector<1x128xf32> to vector<16x128xf32>
    %29 = arith.mulf %24, %28 : vector<16x128xf32>
    %30 = arith.addf %22, %29 : vector<16x128xf32>
    %c0_20 = arith.constant 0 : index
    %c0_21 = arith.constant 0 : index
    %c0_22 = arith.constant 0 : index
    %31 = vector.load %arg4[%c0_20, %c0_21, %c0_22] : memref<1x16x128xf32, #tpu.memory_space<vmem>>, vector<1x16x128xf32>
    %32 = vector.shape_cast %31 : vector<1x16x128xf32> to vector<16x128xf32>
    %33 = vector.shape_cast %30 : vector<16x128xf32> to vector<1x16x128xf32>
    tpu.vector_store %arg4[%c0_20, %c0_21, %c0_22], %33 {strides = array<i32>} : memref<1x16x128xf32, #tpu.memory_space<vmem>>, vector<1x16x128xf32>,
    return
  }
  func.func @transform_0(%arg0: i32, %arg1: i32) -> (i32, i32, i32, i32) {
    %c0_i32 = arith.constant 0 : i32
    %c0_i32_0 = arith.constant 0 : i32
    %c0_i32_1 = arith.constant 0 : i32
    return %arg0, %c0_i32, %arg1, %c0_i32_0 : i32, i32, i32, i32
  }
  func.func @transform_1(%arg0: i32, %arg1: i32) -> (i32, i32) {
    %c0_i32 = arith.constant 0 : i32
    %c0_i32_0 = arith.constant 0 : i32
    %c0_i32_1 = arith.constant 0 : i32
    return %c0_i32, %c0_i32_0 : i32, i32
  }
  func.func @transform_2(%arg0: i32, %arg1: i32) -> (i32, i32, i32) {
    %c0_i32 = arith.constant 0 : i32
    %c0_i32_0 = arith.constant 0 : i32
    return %arg0, %arg1, %c0_i32 : i32, i32, i32
  }
}

</mosaic_0001>

<llo_original>
// kernel: tpu_custom_call.1
$region0: #{tpu_custom_call.1}
  #allocation0 [shape = 'u32[]', space=smem, size = 0x4, offset = 0x4, fixed_abs, tag = 'smem constant byte address 0x4 - core index']
  #allocation1 [shape = 'u32[72,128]{1,0:T(1,128)}', space=vmem, size = 0x9000, scoped, tag = 'internal scratch']
  %s0 = inlined_call_operand.hbm [shape: f32[2,4,16,128], index: 0, kind: input, shape index: {}]
  %s1 = inlined_call_operand.hbm [shape: f32[4,128], index: 1, kind: input, shape index: {}]
  %s2 = inlined_call_operand.hbm [shape: f32[2,16,128], index: 2, kind: output, shape index: {}]
  %s3 = sld [smem:[#allocation0]]
  $region49: #{tpu_custom_call.1} parent=0
    _
  %s5 = ssub.s32 1, %s3
  %s6 = scalar_select 0, %s5, %s3
  $region1: #{tpu_custom_call.1} parent=0
    #allocation2 [shape = 'u8[65536]{0}', space=vmem, size = 0x10000, scoped, tag = 'input window, operand 0']
    #allocation3 [shape = 's32[2]{0}', space=sflag, size = 0x8, scoped, tag = 'scoped memory for tpu_custom_call.1']
    #allocation4 [shape = 's32[2]{0}', space=sflag, size = 0x8, scoped, tag = 'scoped memory for tpu_custom_call.1']
    #allocation5 [shape = 'u8[2048]{0}', space=vmem, size = 0x800, scoped, tag = 'input window, operand 1, single buffered']
    #allocation6 [shape = 's32[1]{0}', space=sflag, size = 0x4, scoped, tag = 'scoped memory for tpu_custom_call.1']
    #allocation7 [shape = 'u8[16384]{0}', space=vmem, size = 0x4000, scoped, tag = 'output window, operand 0']
    %7 = vsyncpa [#allocation3], 0
    %s8 = scalar_lea.sflag [#allocation3], 1
    %9 = vsyncpa %s8, 0
    %10 = vsyncpa [#allocation6], 0
    %11 = vsyncpa [#allocation4], 0
    %s12 = scalar_lea.sflag [#allocation4], 1
    %13 = vsyncpa %s12, 0
    loop: start=0, step=1, limit=4
    $region2: #{tpu_custom_call.1} parent=1 // loop_pre_header
      _
    $region3: #{tpu_custom_call.1} parent=1 // loop_header
      %s15 = sphi 0, %s19
      %p16 = scmp.ge.s32.totalorder %s15, 4
      %s22 = sphi 0, %s34
      %s23 = sphi 0, %s30
      %s24 = sphi 0, %s22
      %s25 = sphi 0, %s23
      %s26 = sphi 0, %s24
      %s27 = sphi 0, %s25
      %s39 = sphi 0, %s41
      %s42 = sphi 0, %s39
      %s43 = sphi 0, %s42
      %s59 = sphi 0, %s43
      %s63 = sphi 0, %s63
      %s65 = sphi 0, %s63
      %s66 = sphi 0, %s65
      %s80 = sphi 0, %s66
      %s88 = sphi 0, %s90
      %s91 = sphi 0, %s88
      %s92 = sphi 0, %s91
      %s108 = sphi 0, %s92
    $region4: #{tpu_custom_call.1} parent=1 // loop_header_branch
      %18 = sbr.rel (%p16) target = $region8
    $region5: #{tpu_custom_call.1} parent=1 // loop_body
      %s20 = ssub.s32 %s15, 1
      %s21 = ssub.s32 %s15, 2
      %s28 = sadd.s32 1, %s23
      %p29 = scmp.ge.s32.totalorder %s28, 1
      %s30 = scalar_select %p29, 0, %s28
      %s31 = sadd.s32 1, %s22
      %s32 = scalar_select %p29, %s31, %s22
      %p33 = scmp.ge.s32.totalorder %s32, 2
      %s34 = scalar_select %p33, 0, %s32
      %s35 = ssub.s32 %s22, %s34
      %s36 = ssub.s32 %s23, %s30
      %s37 = sor.u32 %s35, %s36
      %p38 = scmp.eq.s32.totalorder %s37, 0
      %s40 = sadd.s32 %s39, 1
      %s41 = scalar_select %p38, %s39, %s40
      %p44 = pneg %p38
      %p45 = scmp.eq.s32.totalorder %s15, 1
      %p46 = por %p44, %p45
      %p47 = scmp.ne.s32.totalorder %s39, %s42
      %p48 = scmp.eq.s32.totalorder %s15, 0
      %p49 = por %p47, %p48
      %p50 = scmp.ne.s32.totalorder %s39, %s42
      %p51 = scmp.eq.s32.totalorder %s20, 1
      %p52 = por %p50, %p51
      %p53 = scmp.ne.s32.totalorder %s42, %s43
      %p54 = scmp.eq.s32.totalorder %s20, 0
      %p55 = por %p53, %p54
      %p56 = scmp.ne.s32.totalorder %s42, %s43
      %p57 = scmp.eq.s32.totalorder %s21, 1
      %p58 = por %p56, %p57
      %p60 = scmp.ne.s32.totalorder %s43, %s59
      %p61 = scmp.eq.s32.totalorder %s21, 0
      %p62 = por %p60, %p61
      %s64 = sadd.s32 %s63, 1
      %p67 = scmp.eq.s32.totalorder %s15, 1
      %p68 = scmp.ne.s32.totalorder %s63, %s65
      %p69 = scmp.eq.s32.totalorder %s15, 0
      %p70 = por %p68, %p69
      %p71 = scmp.ne.s32.totalorder %s63, %s65
      %p72 = scmp.eq.s32.totalorder %s20, 1
      %p73 = por %p71, %p72
      %p74 = scmp.ne.s32.totalorder %s65, %s66
      %p75 = scmp.eq.s32.totalorder %s20, 0
      %p76 = por %p74, %p75
      %p77 = scmp.ne.s32.totalorder %s65, %s66
      %p78 = scmp.eq.s32.totalorder %s21, 1
      %p79 = por %p77, %p78
      %p81 = scmp.ne.s32.totalorder %s66, %s80
      %p82 = scmp.eq.s32.totalorder %s21, 0
      %p83 = por %p81, %p82
      %s84 = ssub.s32 %s22, %s34
      %s85 = ssub.s32 %s23, %s30
      %s86 = sor.u32 %s84, %s85
      %p87 = scmp.eq.s32.totalorder %s86, 0
      %s89 = sadd.s32 %s88, 1
      %s90 = scalar_select %p87, %s88, %s89
      %p93 = pneg %p87
      %p94 = scmp.eq.s32.totalorder %s15, 1
      %p95 = por %p93, %p94
      %p96 = scmp.ne.s32.totalorder %s88, %s91
      %p97 = scmp.eq.s32.totalorder %s15, 0
      %p98 = por %p96, %p97
      %p99 = scmp.ne.s32.totalorder %s88, %s91
      %p100 = scmp.eq.s32.totalorder %s20, 1
      %p101 = por %p99, %p100
      %p102 = scmp.ne.s32.totalorder %s91, %s92
      %p103 = scmp.eq.s32.totalorder %s20, 0
      %p104 = por %p102, %p103
      %p105 = scmp.ne.s32.totalorder %s91, %s92
      %p106 = scmp.eq.s32.totalorder %s21, 1
      %p107 = por %p105, %p106
      %p109 = scmp.ne.s32.totalorder %s92, %s108
      %p110 = scmp.eq.s32.totalorder %s21, 0
      %p111 = por %p109, %p110
      %p112 = scmp.le.s32.totalorder 1, %s15
      %p113 = scmp.lt.s32.totalorder %s15, 3
      %p114 = pnand %p112, %p113
      %p115 = pneg %p114
      // Predicated region
      $region9: #{tpu_custom_call.1} parent=5 // pred_check
        _
      $region10: #{tpu_custom_call.1} parent=5 // pred_check_branch
        %117 = sbr.rel (%p114) target = $region12
      $region11: #{tpu_custom_call.1} parent=5 // pred_region
        %s118 = ssub.s32 %s15, 1
        // Predicated region
        $region13: #{tpu_custom_call.1} parent=11 // pred_check
          %p119 = pneg %p76
        $region14: #{tpu_custom_call.1} parent=11 // pred_check_branch
          %121 = sbr.rel (%p119) target = $region16
        $region15: #{tpu_custom_call.1} parent=11 // pred_region
          %123 = vsyncadd [#allocation6], 0
          %s125 = sshll.u32 %s1, 4
          %s126 = int_to_ptr.hbm [resolvable:$true] %s125
          %s127 = sshll.u32 [#allocation5], 4
          %s128 = int_to_ptr.vmem [resolvable:$true] %s127
          %130 = dma.hbm_to_vmem [thread:$0]  %s126, 64, %s128, [#allocation6]
        $region16: #{tpu_custom_call.1} parent=11 // pred_fallthru
          _
      $region12: #{tpu_custom_call.1} parent=5 // pred_fallthru
        _
      %p131 = scmp.lt.s32.totalorder %s15, 2
      // Predicated region
      $region17: #{tpu_custom_call.1} parent=5 // pred_check
        %p132 = pneg %p131
      $region18: #{tpu_custom_call.1} parent=5 // pred_check_branch
        %134 = sbr.rel (%p132) target = $region20
      $region19: #{tpu_custom_call.1} parent=5 // pred_region
        // Predicated region
        $region21: #{tpu_custom_call.1} parent=19 // pred_check
          %p135 = pneg %p49
        $region22: #{tpu_custom_call.1} parent=19 // pred_check_branch
          %137 = sbr.rel (%p135) target = $region24
        $region23: #{tpu_custom_call.1} parent=19 // pred_region
          %s138 = sand.u32 %s39, 1
          %s139 = scalar_lea.sflag [#allocation3], %s138
          %s140 = sand.u32 %s39, 1
          %s141 = smul.addr %s140, 64
          %s142 = scalar_lea.vmem [#allocation2], %s141
          %s143 = smul.u32 2, %s23
          %145 = vsyncadd %s139, 0
          %s146 = smul.addr %s22, 8
          %s147 = sadd.s32 %s143, %s146
          %s148 = smul.addr %s147, 8
          %s149 = scalar_lea.hbm %s0, %s148
          %s150 = sshll.u32 %s149, 4
          %s151 = int_to_ptr.hbm [resolvable:$true] %s150
          %s152 = sshll.u32 %s142, 4
          %s153 = int_to_ptr.vmem [resolvable:$true] %s152
          %158 = dma.hbm_to_vmem [thread:$0]  %s151, 1024, %s153, %s139, 128, 128, 8
        $region24: #{tpu_custom_call.1} parent=19 // pred_fallthru
          _
      $region20: #{tpu_custom_call.1} parent=5 // pred_fallthru
        _
      %p159 = scmp.le.s32.totalorder 1, %s15
      %p160 = scmp.lt.s32.totalorder %s15, 3
      %p161 = pnand %p159, %p160
      %p162 = pneg %p161
      // Predicated region
      $region25: #{tpu_custom_call.1} parent=5 // pred_check
        _
      $region26: #{tpu_custom_call.1} parent=5 // pred_check_branch
        %164 = sbr.rel (%p161) target = $region28
      $region27: #{tpu_custom_call.1} parent=5 // pred_region
        %s165 = ssub.s32 %s15, 1
        %s166 = sand.u32 %s42, 1
        %s167 = scalar_lea.sflag [#allocation3], %s166
        %s168 = sand.u32 %s42, 1
        %s169 = smul.addr %s168, 64
        %s170 = scalar_lea.vmem [#allocation2], %s169
        // Predicated region
        $region29: #{tpu_custom_call.1} parent=27 // pred_check
          %p171 = pneg %p55
        $region30: #{tpu_custom_call.1} parent=27 // pred_check_branch
          %173 = sbr.rel (%p171) target = $region32
        $region31: #{tpu_custom_call.1} parent=27 // pred_region
          %175 = dma.done %s167, 1024
        $region32: #{tpu_custom_call.1} parent=27 // pred_fallthru
          _
        // Predicated region
        $region33: #{tpu_custom_call.1} parent=27 // pred_check
          %p176 = pneg %p76
        $region34: #{tpu_custom_call.1} parent=27 // pred_check_branch
          %178 = sbr.rel (%p176) target = $region36
        $region35: #{tpu_custom_call.1} parent=27 // pred_region
          %180 = dma.done [#allocation6], 64
        $region36: #{tpu_custom_call.1} parent=27 // pred_fallthru
          _
        %s181 = sand.u32 %s42, 1
        %s182 = scalar_lea.sflag [#allocation3], %s181
        %s183 = sand.u32 %s42, 1
        %s184 = smul.addr %s183, 64
        %s185 = scalar_lea.vmem [#allocation2], %s184
        %p186 = pneg %p55
        %p187 = pneg %p52
        %p188 = pneg %p76
        %p189 = pneg %p73
        %p190 = pneg %p104
        %p191 = pneg %p101
        %s192 = sand.u32 %s91, 1
        %s193 = scalar_lea.sflag [#allocation4], %s192
        %s194 = sand.u32 %s91, 1
        %s195 = smul.addr %s194, 16
        %s196 = scalar_lea.vmem [#allocation7], %s195
        %s197 = smul.u32 2, %s25
        %s198 = smul.u32 2, %s25
        %v199 = vld [vmem:[%s170] sm:$0xff]
        %v200 = vld [vmem:[%s170 + $0x8] sm:$0xff]
        %v201 = vld [vmem:[#allocation5] sm:$0x1]
        %v202 = vperm.slane %v201, 0
        %v203 = vmul.f32 %v199, %v202
        %v204 = vmul.f32 %v200, %v202
        %s205 = scalar_lea.vmem %s170, 16 [#allocation2]
        %v206 = vld [vmem:[%s205] sm:$0xff]
        %v207 = vld [vmem:[%s205 + $0x8] sm:$0xff]
        %v208 = vld [vmem:[#allocation5 + $0x1] sm:$0x1]
        %v209 = vperm.slane %v208, 0
        %v210 = vmul.f32 %v206, %v209
        %v211 = vmul.f32 %v207, %v209
        %v212 = vadd.f32 %v203, %v210
        %v213 = vadd.f32 %v204, %v211
        %s214 = scalar_lea.vmem %s170, 32 [#allocation2]
        %v215 = vld [vmem:[%s214] sm:$0xff]
        %v216 = vld [vmem:[%s214 + $0x8] sm:$0xff]
        %v217 = vld [vmem:[#allocation5 + $0x2] sm:$0x1]
        %v218 = vperm.slane %v217, 0
        %v219 = vmul.f32 %v215, %v218
        %v220 = vmul.f32 %v216, %v218
        %v221 = vadd.f32 %v212, %v219
        %v222 = vadd.f32 %v213, %v220
        %s223 = scalar_lea.vmem %s170, 48 [#allocation2]
        %v224 = vld [vmem:[%s223] sm:$0xff]
        %v225 = vld [vmem:[%s223 + $0x8] sm:$0xff]
        %v226 = vld [vmem:[#allocation5 + $0x3] sm:$0x1]
        %v227 = vperm.slane %v226, 0
        %v228 = vmul.f32 %v224, %v227
        %v229 = vmul.f32 %v225, %v227
        %v230 = vadd.f32 %v221, %v228
        %v231 = vadd.f32 %v222, %v229
        %232 = vst [vmem:[%s196] sm:$0xff] %v230
        %233 = vst [vmem:[%s196 + $0x8] sm:$0xff] %v231
        %s234 = sand.u32 %s91, 1
        %s235 = scalar_lea.sflag [#allocation4], %s234
        %s236 = sand.u32 %s91, 1
        %s237 = smul.addr %s236, 16
        %s238 = scalar_lea.vmem [#allocation7], %s237
        // Predicated region
        $region37: #{tpu_custom_call.1} parent=27 // pred_check
          %p239 = pneg %p101
        $region38: #{tpu_custom_call.1} parent=27 // pred_check_branch
          %241 = sbr.rel (%p239) target = $region40
        $region39: #{tpu_custom_call.1} parent=27 // pred_region
          %s242 = smul.u32 2, %s25
          %244 = vsyncadd %s235, 0
          %s245 = smul.addr %s24, 2
          %s246 = sadd.s32 %s242, %s245
          %s247 = smul.addr %s246, 8
          %s248 = scalar_lea.hbm %s2, %s247
          %s249 = sshll.u32 %s238, 4
          %s250 = int_to_ptr.vmem [resolvable:$true] %s249
          %s251 = sshll.u32 %s248, 4
          %s252 = int_to_ptr.hbm [resolvable:$true] %s251
          %257 = dma.vmem_to_hbm [thread:$0]  %s250, 256, %s252, %s235, 128, 128, 8
        $region40: #{tpu_custom_call.1} parent=27 // pred_fallthru
          _
      $region28: #{tpu_custom_call.1} parent=5 // pred_fallthru
        _
      %p258 = scmp.le.s32.totalorder 2, %s15
      // Predicated region
      $region41: #{tpu_custom_call.1} parent=5 // pred_check
        %p259 = pneg %p258
      $region42: #{tpu_custom_call.1} parent=5 // pred_check_branch
        %261 = sbr.rel (%p259) target = $region44
      $region43: #{tpu_custom_call.1} parent=5 // pred_region
        %s262 = ssub.s32 %s15, 2
        // Predicated region
        $region45: #{tpu_custom_call.1} parent=43 // pred_check
          %p263 = pneg %p107
        $region46: #{tpu_custom_call.1} parent=43 // pred_check_branch
          %265 = sbr.rel (%p263) target = $region48
        $region47: #{tpu_custom_call.1} parent=43 // pred_region
          %s266 = sand.u32 %s92, 1
          %s267 = scalar_lea.sflag [#allocation4], %s266
          %s268 = sand.u32 %s92, 1
          %s269 = smul.addr %s268, 16
          %s270 = scalar_lea.vmem [#allocation7], %s269
          %272 = dma.done %s267, 256
        $region48: #{tpu_custom_call.1} parent=43 // pred_fallthru
          _
      $region44: #{tpu_custom_call.1} parent=5 // pred_fallthru
        _
    $region6: #{tpu_custom_call.1} parent=1 // loop_footer
      %s19 = sadd.s32 1, %s15
    $region7: #{tpu_custom_call.1} parent=1 // loop_footer_branch
      %14 = sbr.rel target = $region3
    $region8: #{tpu_custom_call.1} parent=1 // loop_exit
      _
    %273 = vsyncpa [#allocation3], 1
    %s274 = scalar_lea.sflag [#allocation3], 1
    %275 = vsyncpa %s274, 1
    %276 = vsyncpa [#allocation6], 1
    %277 = vsyncpa [#allocation4], 1
    %s278 = scalar_lea.sflag [#allocation4], 1
    %279 = vsyncpa %s278, 1

</llo_original>
